<compile_context>
chip_gen: v6e
topology: v6e:2x2x1
jax: 0.10.0
libtpu: 0.0.40
codegen_flags: <defaults>
</compile_context>

<pallas_src>
import jax
import jax.numpy as jnp
from jax import lax
from jax.experimental import pallas as pl
from jax.experimental.pallas import tpu as pltpu

LN_EPS = 1e-5  # nn.LayerNorm default eps


def _round_up(n, m):
    return ((n + m - 1) // m) * m


def _vmem_usable_bytes():
    """Per-TensorCore VMEM we are willing to ask for (capacity minus headroom)."""
    cap = 64 << 20
    try:
        cap = int(pltpu.get_tpu_info().vmem_capacity_bytes)
    except Exception:
        pass
    # Leave headroom for Mosaic internal scratch / pipeline buffers:
    # v7x 64 MiB/TC -> ~56 MiB usable, v5e/v6e 128 MiB -> ~112 MiB usable.
    return max(cap - max(8 << 20, cap // 8), 32 << 20)


def _grid_invariant_spec(block_shape, index_map):
    """Single-buffered BlockSpec for operands whose block never changes across the grid."""
    if hasattr(pl, "Buffered"):
        try:
            return pl.BlockSpec(block_shape, index_map, pipeline_mode=pl.Buffered(1))
        except Exception:
            pass
    return pl.BlockSpec(block_shape, index_map)


def _layer_norm(x_f32, gamma_ref, beta_ref):
    mean = jnp.mean(x_f32, axis=-1, keepdims=True)
    xc = x_f32 - mean
    var = jnp.mean(xc * xc, axis=-1, keepdims=True)  # biased variance (LayerNorm)
    inv = lax.rsqrt(var + LN_EPS)
    g = gamma_ref[...].astype(jnp.float32)
    b = beta_ref[...].astype(jnp.float32)
    return xc * inv * g + b


def _onehot_rows(ids_tile, v_start, v_size, dtype):
    # ids_tile: (TB, 1) int32; one-hot over the vocab window [v_start, v_start + v_size).
    local = ids_tile - v_start
    iota = lax.broadcasted_iota(jnp.int32, (ids_tile.shape[0], v_size), 1)
    return (local == iota).astype(dtype)


def gene_encoder_resident_kernel(ids_ref, table_ref, gamma_ref, beta_ref, out_ref):
    # Whole table resident in VMEM; gather = one-hot @ table on the MXU.
    onehot = _onehot_rows(ids_ref[...], 0, table_ref.shape[0], table_ref.dtype)
    x = jnp.dot(onehot, table_ref[...], preferred_element_type=jnp.float32)
    out_ref[...] = _layer_norm(x, gamma_ref, beta_ref).astype(out_ref.dtype)


def gene_encoder_streamed_kernel(ids_ref, table_ref, gamma_ref, beta_ref, out_ref, acc_ref):
    # Table streamed in (TV, D) tiles along grid axis 1; masked one-hot matmul accumulates.
    vi = pl.program_id(1)
    tv = table_ref.shape[0]

    @pl.when(vi == 0)
    def _():
        acc_ref[...] = jnp.zeros_like(acc_ref)

    onehot = _onehot_rows(ids_ref[...], vi * tv, tv, table_ref.dtype)
    acc_ref[...] += jnp.dot(onehot, table_ref[...], preferred_element_type=jnp.float32)

    @pl.when(vi == pl.num_programs(1) - 1)
    def _():
        out_ref[...] = _layer_norm(acc_ref[...], gamma_ref, beta_ref).astype(out_ref.dtype)


def gene_encoder(x, emb_table, gamma, beta, *, token_block=1024, table_block=4096,
                 out_dtype=None, force_streamed=False):
    """x: (B, S) int ids; emb_table: (V, D); gamma/beta: (D,). Returns (B, S, D)."""
    B, S = x.shape
    V, D = emb_table.shape
    out_dtype = emb_table.dtype if out_dtype is None else out_dtype
    N = B * S

    # Sublane-dense token blocks (multiple of 8), large enough to amortize per-step overhead.
    TB = _round_up(min(token_block, _round_up(N, 8)), 8)
    N_pad = _round_up(N, TB)

    # Out-of-range ids are clamped (nn.Embedding would raise); pad tail with id 0.
    ids = jnp.clip(x.reshape(-1).astype(jnp.int32), 0, V - 1)
    ids = jnp.pad(ids, (0, N_pad - N)).reshape(N_pad, 1)

    itemsize = jnp.dtype(emb_table.dtype).itemsize
    out_itemsize = jnp.dtype(out_dtype).itemsize

    usable = _vmem_usable_bytes()
    fixed = (2 * TB * D * out_itemsize   # output double-buffer
             + 2 * TB * 4                # ids double-buffer
             + 4 * D * 4                 # gamma / beta
             + TB * D * 4                # f32 accumulator / LN temporaries
             + (4 << 20))                # Mosaic internal-scratch slack
    table_bytes = V * D * itemsize

    gamma2 = gamma.reshape(1, D)
    beta2 = beta.reshape(1, D)

    if (not force_streamed) and (table_bytes + fixed <= usable):
        # ------------------------- VMEM-resident table path -------------------------
        grid = (N_pad // TB,)
        vmem_limit = int(min(usable, max(2 * table_bytes + fixed, 16 << 20)))
        out = pl.pallas_call(
            gene_encoder_resident_kernel,
            out_shape=jax.ShapeDtypeStruct((N_pad, D), out_dtype),
            grid_spec=pltpu.PrefetchScalarGridSpec(
                num_scalar_prefetch=0,
                grid=grid,
                in_specs=[
                    pl.BlockSpec((TB, 1), lambda i: (i, 0)),             # ids (blocked VMEM)
                    _grid_invariant_spec((V, D), lambda i: (0, 0)),      # table, resident, 1x buffered
                    _grid_invariant_spec((1, D), lambda i: (0, 0)),      # gamma
                    _grid_invariant_spec((1, D), lambda i: (0, 0)),      # beta
                ],
                out_specs=pl.BlockSpec((TB, D), lambda i: (i, 0)),
            ),
            compiler_params=pltpu.CompilerParams(
                dimension_semantics=("parallel",),                       # tokens shard across TCs
                vmem_limit_bytes=vmem_limit,
            ),
        )(ids, emb_table, gamma2, beta2)
    else:
        # --------------------- streamed-table fallback (large V) ---------------------
        tv_budget = max((usable - fixed) // (2 * D * itemsize), 8)
        TV = int(max(8, min(table_block, (tv_budget // 8) * 8, _round_up(V, 8))))
        V_pad = _round_up(V, TV)
        table_p = jnp.pad(emb_table, ((0, V_pad - V), (0, 0)))           # zero rows never selected
        grid = (N_pad // TB, V_pad // TV)
        vmem_limit = int(min(usable, max(2 * TV * D * itemsize + fixed, 16 << 20)))
        out = pl.pallas_call(
            gene_encoder_streamed_kernel,
            out_shape=jax.ShapeDtypeStruct((N_pad, D), out_dtype),
            grid_spec=pltpu.PrefetchScalarGridSpec(
                num_scalar_prefetch=0,
                grid=grid,
                in_specs=[
                    pl.BlockSpec((TB, 1), lambda i, v: (i, 0)),          # ids
                    pl.BlockSpec((TV, D), lambda i, v: (v, 0)),          # table tiles (double-buffered stream)
                    _grid_invariant_spec((1, D), lambda i, v: (0, 0)),   # gamma
                    _grid_invariant_spec((1, D), lambda i, v: (0, 0)),   # beta
                ],
                out_specs=pl.BlockSpec((TB, D), lambda i, v: (i, 0)),
                scratch_shapes=[pltpu.VMEM((TB, D), jnp.float32)],
            ),
            compiler_params=pltpu.CompilerParams(
                dimension_semantics=("parallel", "arbitrary"),
                vmem_limit_bytes=vmem_limit,
            ),
        )(ids, table_p, gamma2, beta2)

    return out[:N].reshape(B, S, D)


if __name__ == "__main__":
    # Module hyperparameters (small, TPU-friendly: D = 128 lanes)
    num_embeddings, embedding_dim, padding_idx = 64, 128, 0
    B, S = 2, 8

    key = jax.random.PRNGKey(0)
    k_emb, k_ids = jax.random.split(key)

    # Deterministic parameter init (matches nn.Embedding N(0,1) + LayerNorm ones/zeros)
    emb_table = jax.random.normal(k_emb, (num_embeddings, embedding_dim), dtype=jnp.float32)
    emb_table = emb_table.at[padding_idx].set(0.0)   # padding_idx row is zeroed at init
    gamma = jnp.ones((embedding_dim,), jnp.float32)
    beta = jnp.zeros((embedding_dim,), jnp.float32)

    x = jax.random.randint(k_ids, (B, S), 0, num_embeddings, dtype=jnp.int32)

    # Pure-JAX reference
    ref = emb_table[x]
    mean = ref.mean(-1, keepdims=True)
    var = ((ref - mean) ** 2).mean(-1, keepdims=True)
    ref = (ref - mean) / jnp.sqrt(var + LN_EPS) * gamma + beta

    # Fast path: VMEM-resident table, one-hot MXU gather.
    y = gene_encoder(x, emb_table, gamma, beta)
    y = jax.block_until_ready(y)
    assert y.shape == (B, S, embedding_dim)
    assert jnp.allclose(y, ref, atol=2e-5), "resident-path mismatch vs reference"

    # Fallback path: streamed table tiles + masked one-hot accumulation.
    y2 = gene_encoder(x, emb_table, gamma, beta,
                      token_block=8, table_block=16, force_streamed=True)
    y2 = jax.block_until_ready(y2)
    assert jnp.allclose(y2, ref, atol=2e-5), "streamed-path mismatch vs reference"

    print("KERNEL_OK")
</pallas_src>

<mosaic_0001>
module attributes {stable_mosaic.version = 11 : i64} {
  func.func @gene_encoder_resident_kernel(%arg0: i32, %arg1: memref<16x1xi32, #tpu.memory_space<vmem>>, %arg2: memref<64x128xf32, #tpu.memory_space<vmem>>, %arg3: memref<1x128xf32, #tpu.memory_space<vmem>>, %arg4: memref<1x128xf32, #tpu.memory_space<vmem>>, %arg5: memref<16x128xf32, #tpu.memory_space<vmem>>) attributes {dimension_semantics = [#tpu.dimension_semantics<parallel>], iteration_bounds = array<i64: 1>, scalar_prefetch = 0 : i64, scratch_operands = 0 : i64, tpu.core_type = #tpu.core_type<tc>, window_params = [{transform_indices = @transform_0, window_bounds = array<i64: 16, 1>}, {pipeline_mode = #tpu.pipeline_mode<synchronous>, transform_indices = @transform_1, window_bounds = array<i64: 64, 128>}, {pipeline_mode = #tpu.pipeline_mode<synchronous>, transform_indices = @transform_2, window_bounds = array<i64: 1, 128>}, {pipeline_mode = #tpu.pipeline_mode<synchronous>, transform_indices = @transform_3, window_bounds = array<i64: 1, 128>}, {transform_indices = @transform_4, window_bounds = array<i64: 16, 128>}]} {
    %c0 = arith.constant 0 : index
    %c0_0 = arith.constant 0 : index
    %0 = vector.load %arg1[%c0, %c0_0] : memref<16x1xi32, #tpu.memory_space<vmem>>, vector<16x1xi32>
    %c0_i32 = arith.constant 0 : i32
    %1 = vector.broadcast %c0_i32 : i32 to vector<16x1xi32>
    %2 = arith.subi %0, %1 : vector<16x1xi32>
    %3 = tpu.iota {dimensions = array<i32: 1>} : vector<16x64xi32>
    %4 = vector.broadcast %2 : vector<16x1xi32> to vector<16x64xi32>
    %5 = arith.cmpi eq, %4, %3 : vector<16x64xi32>
    %6 = arith.extui %5 : vector<16x64xi1> to vector<16x64xi32>
    %7 = arith.sitofp %6 : vector<16x64xi32> to vector<16x64xf32>
    %c0_1 = arith.constant 0 : index
    %c0_2 = arith.constant 0 : index
    %8 = vector.load %arg2[%c0_1, %c0_2] : memref<64x128xf32, #tpu.memory_space<vmem>>, vector<64x128xf32>
    %cst = arith.constant dense<0.000000e+00> : vector<16x128xf32>
    %9 = tpu.matmul %7, %8, %cst {dimension_numbers = #tpu.dot_dimension_numbers<[1], [0], [0], [1], [0, 0, 1, 1], [], []>} : vector<16x64xf32>, vector<64x128xf32>, vector<16x128xf32> -> vector<16x128xf32>
    %cst_3 = arith.constant dense<0.000000e+00> : vector<16xf32>
    %10 = vector.multi_reduction <add>, %9, %cst_3 [1] : vector<16x128xf32> to vector<16xf32>
    %11 = vector.shape_cast %10 : vector<16xf32> to vector<16x1xf32>
    %cst_4 = arith.constant 1.280000e+02 : f32
    %12 = vector.broadcast %cst_4 : f32 to vector<16x1xf32>
    %13 = arith.divf %11, %12 : vector<16x1xf32>
    %14 = vector.broadcast %13 : vector<16x1xf32> to vector<16x128xf32>
    %15 = arith.subf %9, %14 : vector<16x128xf32>
    %16 = arith.mulf %15, %15 : vector<16x128xf32>
    %cst_5 = arith.constant dense<0.000000e+00> : vector<16xf32>
    %17 = vector.multi_reduction <add>, %16, %cst_5 [1] : vector<16x128xf32> to vector<16xf32>
    %18 = vector.shape_cast %17 : vector<16xf32> to vector<16x1xf32>
    %cst_6 = arith.constant 1.280000e+02 : f32
    %19 = vector.broadcast %cst_6 : f32 to vector<16x1xf32>
    %20 = arith.divf %18, %19 : vector<16x1xf32>
    %cst_7 = arith.constant 9.99999974E-6 : f32
    %21 = vector.broadcast %cst_7 : f32 to vector<16x1xf32>
    %22 = arith.addf %20, %21 : vector<16x1xf32>
    %23 = math.rsqrt %22 : vector<16x1xf32>
    %c0_8 = arith.constant 0 : index
    %c0_9 = arith.constant 0 : index
    %24 = vector.load %arg3[%c0_8, %c0_9] : memref<1x128xf32, #tpu.memory_space<vmem>>, vector<1x128xf32>
    %c0_10 = arith.constant 0 : index
    %c0_11 = arith.constant 0 : index
    %25 = vector.load %arg4[%c0_10, %c0_11] : memref<1x128xf32, #tpu.memory_space<vmem>>, vector<1x128xf32>
    %26 = vector.broadcast %23 : vector<16x1xf32> to vector<16x128xf32>
    %27 = arith.mulf %15, %26 : vector<16x128xf32>
    %28 = vector.broadcast %24 : vector<1x128xf32> to vector<16x128xf32>
    %29 = arith.mulf %27, %28 : vector<16x128xf32>
    %30 = vector.broadcast %25 : vector<1x128xf32> to vector<16x128xf32>
    %31 = arith.addf %29, %30 : vector<16x128xf32>
    %c0_12 = arith.constant 0 : index
    %c0_13 = arith.constant 0 : index
    %32 = vector.load %arg5[%c0_12, %c0_13] : memref<16x128xf32, #tpu.memory_space<vmem>>, vector<16x128xf32>
    tpu.vector_store %arg5[%c0_12, %c0_13], %31 {strides = array<i32>} : memref<16x128xf32, #tpu.memory_space<vmem>>, vector<16x128xf32>,
    return
  }
  func.func @transform_0(%arg0: i32) -> (i32, i32) {
    %c0_i32 = arith.constant 0 : i32
    %c0_i32_0 = arith.constant 0 : i32
    return %arg0, %c0_i32 : i32, i32
  }
  func.func @transform_1(%arg0: i32) -> (i32, i32) {
    %c0_i32 = arith.constant 0 : i32
    %c0_i32_0 = arith.constant 0 : i32
    %c0_i32_1 = arith.constant 0 : i32
    return %c0_i32, %c0_i32_0 : i32, i32
  }
  func.func @transform_2(%arg0: i32) -> (i32, i32) {
    %c0_i32 = arith.constant 0 : i32
    %c0_i32_0 = arith.constant 0 : i32
    %c0_i32_1 = arith.constant 0 : i32
    return %c0_i32, %c0_i32_0 : i32, i32
  }
  func.func @transform_3(%arg0: i32) -> (i32, i32) {
    %c0_i32 = arith.constant 0 : i32
    %c0_i32_0 = arith.constant 0 : i32
    %c0_i32_1 = arith.constant 0 : i32
    return %c0_i32, %c0_i32_0 : i32, i32
  }
  func.func @transform_4(%arg0: i32) -> (i32, i32) {
    %c0_i32 = arith.constant 0 : i32
    %c0_i32_0 = arith.constant 0 : i32
    return %arg0, %c0_i32 : i32, i32
  }
}

</mosaic_0001>

<llo_original>
// kernel: tpu_custom_call.1
$region0: #{tpu_custom_call.1}
  #allocation0 [shape = 'u32[]', space=smem, size = 0x4, offset = 0x4, fixed_abs, tag = 'smem constant byte address 0x4 - core index']
  #allocation1 [shape = 'u32[144,128]{1,0:T(1,128)}', space=vmem, size = 0x12000, scoped, tag = 'internal scratch']
  %s0 = inlined_call_operand.vmem [shape: s32[16,1], index: 0, kind: input, shape index: {}]
  %s1 = inlined_call_operand.hbm [shape: f32[64,128], index: 1, kind: input, shape index: {}]
  %s2 = inlined_call_operand.vmem [shape: f32[1,128], index: 2, kind: input, shape index: {}]
  %s3 = inlined_call_operand.vmem [shape: f32[1,128], index: 3, kind: input, shape index: {}]
  %s4 = inlined_call_operand.hbm [shape: f32[16,128], index: 4, kind: output, shape index: {}]
  %s5 = sld [smem:[#allocation0]]
  $region30: #{tpu_custom_call.1} parent=0
    _
  %s7 = ssub.s32 1, %s5
  %s8 = scalar_select 0, %s7, %s5
  $region1: #{tpu_custom_call.1} parent=0
    #allocation2 [shape = 'u8[32768]{0}', space=vmem, size = 0x8000, scoped, tag = 'input window, operand 1, single buffered']
    #allocation3 [shape = 's32[1]{0}', space=sflag, size = 0x4, scoped, tag = 'scoped memory for tpu_custom_call.1']
    #allocation4 [shape = 's32[1]{0}', space=sflag, size = 0x4, scoped, tag = 'scoped memory for tpu_custom_call.1']
    #allocation5 [shape = 'u8[8192]{0}', space=vmem, size = 0x2000, scoped, tag = 'output window, operand 0, single buffered']
    %9 = vsyncpa [#allocation3], 0
    %10 = vsyncpa [#allocation4], 0
    // Predicated region
    $region2: #{tpu_custom_call.1} parent=1 // pred_check
      _
    $region3: #{tpu_custom_call.1} parent=1 // pred_check_branch
      %12 = sbr.rel (0) target = $region5
    $region4: #{tpu_custom_call.1} parent=1 // pred_region
      _
    $region5: #{tpu_custom_call.1} parent=1 // pred_fallthru
      _
    // Predicated region
    $region6: #{tpu_custom_call.1} parent=1 // pred_check
      _
    $region7: #{tpu_custom_call.1} parent=1 // pred_check_branch
      %14 = sbr.rel (0) target = $region9
    $region8: #{tpu_custom_call.1} parent=1 // pred_region
      %s16 = ssub.s32 1024, 1024
      %17 = vsyncadd [#allocation3], %s16
      %s18 = sshll.u32 [#allocation2], 4
      %s19 = int_to_ptr.vmem [resolvable:$true] %s18
      %24 = dma.hbm_to_vmem [thread:$0]  %s1, 1024, %s19, [#allocation3], 128, 128, 8
    $region9: #{tpu_custom_call.1} parent=1 // pred_fallthru
      _
    // Predicated region
    $region10: #{tpu_custom_call.1} parent=1 // pred_check
      _
    $region11: #{tpu_custom_call.1} parent=1 // pred_check_branch
      %26 = sbr.rel (0) target = $region13
    $region12: #{tpu_custom_call.1} parent=1 // pred_region
      _
    $region13: #{tpu_custom_call.1} parent=1 // pred_fallthru
      _
    // Predicated region
    $region14: #{tpu_custom_call.1} parent=1 // pred_check
      _
    $region15: #{tpu_custom_call.1} parent=1 // pred_check_branch
      %28 = sbr.rel (0) target = $region17
    $region16: #{tpu_custom_call.1} parent=1 // pred_region
      _
    $region17: #{tpu_custom_call.1} parent=1 // pred_fallthru
      _
    // Predicated region
    $region18: #{tpu_custom_call.1} parent=1 // pred_check
      _
    $region19: #{tpu_custom_call.1} parent=1 // pred_check_branch
      %30 = sbr.rel (0) target = $region21
    $region20: #{tpu_custom_call.1} parent=1 // pred_region
      %31 = dma.done [#allocation3], 1024
    $region21: #{tpu_custom_call.1} parent=1 // pred_fallthru
      _
    %v32 = vld [vmem:[%s0] sm:$0xff]
    %v33 = vld [vmem:[%s0 + $0x8] sm:$0xff]
    %v34 = vlaneseq
    %v35 = vand.u32 %v34, 127
    %36 = vset.pattern.permute.xlu0 0
    %37 = vperm.xlu0 %36, %v32
    %v38 = vpop.permute.xlu0 %37
    %39 = vset.pattern.permute.xlu0 0
    %40 = vperm.xlu0 %39, %v33
    %v41 = vpop.permute.xlu0 %40
    %vm42 = vcmp.eq.s32.totalorder %v38, %v35
    %vm43 = vcmp.eq.s32.totalorder %v41, %v35
    %v44 = vsel %vm42, 1, 0
    %v45 = vsel %vm43, 1, 0
    %v46 = vcvt.s32.f32 %v44
    %v47 = vcvt.s32.f32 %v45
    %v48 = vld [vmem:[#allocation2] sm:$0xff]
    %v49 = vld [vmem:[#allocation2 + $0x8] sm:$0xff]
    %v50 = vld [vmem:[#allocation2 + $0x10] sm:$0xff]
    %v51 = vld [vmem:[#allocation2 + $0x18] sm:$0xff]
    %v52 = vld [vmem:[#allocation2 + $0x20] sm:$0xff]
    %v53 = vld [vmem:[#allocation2 + $0x28] sm:$0xff]
    %v54 = vld [vmem:[#allocation2 + $0x30] sm:$0xff]
    %v55 = vld [vmem:[#allocation2 + $0x38] sm:$0xff]
    %vm56 = vcmask 523264
    %v58 = vsel %vm56, %v46, 0
    %v61 = vsel %vm56, %v47, 0
    %63 = vmatprep.subr.mxu0 0.0
    %64 = vmatpush1.msra.mxu0 0.0
    %65 = vmatprep.subr.mxu0 0.0
    %66 = vmatpush1.msra.mxu0 0.0
    %67 = vmatprep.subr.mxu0 0.0
    %68 = vmatpush1.msra.mxu0 0.0
    %69 = vmatprep.subr.mxu0 0.0
    %70 = vmatpush1.msra.mxu0 0.0
    %71 = vmatprep.subr.mxu0 0.0
    %72 = vmatpush1.msra.mxu0 0.0
    %73 = vmatprep.subr.mxu0 0.0
    %74 = vmatpush1.msra.mxu0 0.0
    %75 = vmatprep.subr.mxu0 0.0
    %76 = vmatpush1.msra.mxu0 0.0
    %77 = vmatprep.subr.mxu0 0.0
    %78 = vmatpush1.msra.mxu0 0.0
    %79 = vmatprep.subr.mxu0 0.0
    %80 = vmatpush1.msra.mxu0 %v55
    %81 = vmatprep.subr.mxu0 0.0
    %82 = vmatpush1.msra.mxu0 %v54
    %83 = vmatprep.subr.mxu0 0.0
    %84 = vmatpush1.msra.mxu0 %v53
    %85 = vmatprep.subr.mxu0 0.0
    %86 = vmatpush1.msra.mxu0 %v52
    %87 = vmatprep.subr.mxu0 0.0
    %88 = vmatpush1.msra.mxu0 %v51
    %89 = vmatprep.subr.mxu0 0.0
    %90 = vmatpush1.msra.mxu0 %v50
    %91 = vmatprep.subr.mxu0 0.0
    %92 = vmatpush1.msra.mxu0 %v49
    %93 = vmatprep.subr.mxu0 0.0
    %94 = vmatpush1.msra.mxu0 %v48
    %95 = vmatprep.subr.mxu0 0.0
    %96 = vmatpush2.msra.mxu0 0.0
    %97 = vmatprep.subr.mxu0 0.0
    %98 = vmatpush2.msra.mxu0 0.0
    %99 = vmatprep.subr.mxu0 0.0
    %100 = vmatpush2.msra.mxu0 0.0
    %101 = vmatprep.subr.mxu0 0.0
    %102 = vmatpush2.msra.mxu0 0.0
    %103 = vmatprep.subr.mxu0 0.0
    %104 = vmatpush2.msra.mxu0 0.0
    %105 = vmatprep.subr.mxu0 0.0
    %106 = vmatpush2.msra.mxu0 0.0
    %107 = vmatprep.subr.mxu0 0.0
    %108 = vmatpush2.msra.mxu0 0.0
    %109 = vmatprep.subr.mxu0 0.0
    %110 = vmatpush2.msra.mxu0 0.0
    %111 = vmatprep.subr.mxu0 0.0
    %112 = vmatpush2.msra.mxu0 0.0
    %113 = vmatprep.subr.mxu0 0.0
    %114 = vmatpush2.msra.mxu0 0.0
    %115 = vmatprep.subr.mxu0 0.0
    %116 = vmatpush2.msra.mxu0 0.0
    %117 = vmatprep.subr.mxu0 0.0
    %118 = vmatpush2.msra.mxu0 0.0
    %119 = vmatprep.subr.mxu0 0.0
    %120 = vmatpush2.msra.mxu0 0.0
    %121 = vmatprep.subr.mxu0 0.0
    %122 = vmatpush2.msra.mxu0 0.0
    %123 = vmatprep.subr.mxu0 0.0
    %124 = vmatpush2.msra.mxu0 0.0
    %125 = vmatprep.subr.mxu0 0.0
    %126 = vmatpush2.msra.mxu0 0.0
    %127 = vmatprep.mubr.f32.mxu0 0.0
    %128 = vmatmul.mubr.f32.gmra.mxu0 %v58
    %v129 = vpop.f32.mrf.mxu0
    %v130 = vadd.f32 0.0, %v129
    %v131 = vpop.f32.mrf.mxu0
    %132 = vmatprep.mubr.f32.mxu0 0.0
    %133 = vmatmul.mubr.f32.gmra.mxu0 %v61
    %v134 = vpop.f32.mrf.mxu0
    %v135 = vadd.f32 0.0, %v134
    %v136 = vpop.f32.mrf.mxu0
    %137 = vdwg.mxu0
    %138 = vadd.xlane.f32.xlu0 %v130
    %v139 = vpop.xlane.xlu0 %138
    %140 = vadd.xlane.f32.xlu0 %v135
    %v141 = vpop.xlane.xlu0 %140
    %v142 = vrcp.pop 128.0
    %v143 = vmul.f32 %v139, %v142
    %v144 = vmul.f32 %v141, %v142
    %v145 = vsub.f32 %v130, %v143
    %v146 = vsub.f32 %v135, %v144
    %v147 = vmul.f32 %v145, %v145
    %v148 = vmul.f32 %v146, %v146
    %149 = vadd.xlane.f32.xlu0 %v147
    %v150 = vpop.xlane.xlu0 %149
    %151 = vadd.xlane.f32.xlu0 %v148
    %v152 = vpop.xlane.xlu0 %151
    %v153 = vmul.f32 %v150, %v142
    %v154 = vmul.f32 %v152, %v142
    %v155 = vadd.f32 %v153, 1e-05
    %v156 = vadd.f32 %v154, 1e-05
    %v157 = vrsqrt.pop %v155
    %v158 = vrsqrt.pop %v156
    %v159 = vld [vmem:[%s2] sm:$0x1]
    %v160 = vld [vmem:[%s3] sm:$0x1]
    %v161 = vmul.f32 %v145, %v157
    %v162 = vmul.f32 %v146, %v158
    %v164 = vlaneseq
    %v165 = vshrl.u32 %v164, 7
    %v166 = vsub.s32 0, %v165
    %v167 = vrot.slane %v159, %v166
    %v169 = vmul.f32 %v161, %v167
    %v170 = vmul.f32 %v162, %v167
    %v172 = vlaneseq
    %v173 = vshrl.u32 %v172, 7
    %v174 = vsub.s32 0, %v173
    %v175 = vrot.slane %v160, %v174
    %v177 = vadd.f32 %v169, %v175
    %v178 = vadd.f32 %v170, %v175
    %179 = vst [vmem:[#allocation5] sm:$0xff] %v177
    %180 = vst [vmem:[#allocation5 + $0x8] sm:$0xff] %v178
    // Predicated region
    $region22: #{tpu_custom_call.1} parent=1 // pred_check
      _
    $region23: #{tpu_custom_call.1} parent=1 // pred_check_branch
      %182 = sbr.rel (0) target = $region25
    $region24: #{tpu_custom_call.1} parent=1 // pred_region
      %s184 = ssub.s32 256, 256
      %185 = vsyncadd [#allocation4], %s184
      %s186 = sshll.u32 [#allocation5], 4
      %s187 = int_to_ptr.vmem [resolvable:$true] %s186
      %192 = dma.vmem_to_hbm [thread:$0]  %s187, 256, %s4, [#allocation4], 128, 128, 8
    $region25: #{tpu_custom_call.1} parent=1 // pred_fallthru
      _
    // Predicated region
    $region26: #{tpu_custom_call.1} parent=1 // pred_check
      _
    $region27: #{tpu_custom_call.1} parent=1 // pred_check_branch
      %194 = sbr.rel (0) target = $region29
    $region28: #{tpu_custom_call.1} parent=1 // pred_region
      %195 = dma.done [#allocation4], 256
    $region29: #{tpu_custom_call.1} parent=1 // pred_fallthru
      _
    %196 = vsyncpa [#allocation3], 1
    %197 = vsyncpa [#allocation4], 1

</llo_original>
